<compile_context>
chip_gen: v6e
topology: v6e:2x2x1
jax: 0.10.0
libtpu: 0.0.40
codegen_flags: <defaults>
</compile_context>

<pallas_src>
import functools

import jax
import jax.numpy as jnp
from jax.experimental import pallas as pl
from jax.experimental.pallas import tpu as pltpu

_LANE = 128
# Sublane packing per element byte-width: f32 -> 8 rows/vreg, bf16 -> 16, int8/fp8 -> 32.
_SUBLANE = {4: 8, 2: 16, 1: 32}


def _round_up(x, m):
    return (x + m - 1) // m * m


def _plan_tile(dim, tile, multiple):
    """Pick an effective tile (multiple-aligned) and padded extent.

    Keeps the tile <= `tile` while balancing it so the last tile is not
    mostly padding (e.g. M=300 with tm=256 -> tm_e=152, M_p=304 not 512).
    """
    tile = max(multiple, _round_up(int(tile), multiple))
    dim_r = _round_up(int(dim), multiple)
    if tile >= dim_r:
        t = dim_r
    else:
        n = -(-dim_r // tile)
        t = _round_up(-(-dim_r // n), multiple)
    return t, _round_up(int(dim), t)


# --------------------------- kernel bodies ----------------------------------


def _matmul_bias_kernel(x_ref, w_ref, b_ref, o_ref, acc_ref):
    k = pl.program_id(2)

    @pl.when(k == 0)
    def _():
        # Fold the bias into the accumulator init (saves an epilogue add).
        acc_ref[...] = jnp.broadcast_to(
            b_ref[...].astype(jnp.float32), acc_ref.shape)

    acc_ref[...] += jax.lax.dot_general(
        x_ref[...], w_ref[...],
        dimension_numbers=(((1,), (0,)), ((), ())),
        preferred_element_type=jnp.float32,
    )

    @pl.when(k == pl.num_programs(2) - 1)
    def _():
        o_ref[...] = acc_ref[...].astype(o_ref.dtype)


def _matmul_nobias_kernel(x_ref, w_ref, o_ref, acc_ref):
    k = pl.program_id(2)

    @pl.when(k == 0)
    def _():
        acc_ref[...] = jnp.zeros_like(acc_ref)

    acc_ref[...] += jax.lax.dot_general(
        x_ref[...], w_ref[...],
        dimension_numbers=(((1,), (0,)), ((), ())),
        preferred_element_type=jnp.float32,
    )

    @pl.when(k == pl.num_programs(2) - 1)
    def _():
        o_ref[...] = acc_ref[...].astype(o_ref.dtype)


# --------------------------- jitted forward core ----------------------------


@functools.partial(
    jax.jit,
    static_argnames=("out_features", "tm", "tk_e", "tn_e", "compute_dtype"))
def _cpl_forward(x, w_kn, b_row, *, out_features, tm, tk_e, tn_e,
                 compute_dtype):
    """x: (..., K); w_kn: pre-transposed padded (K_p, N_p); b_row: (1, N_p)|None."""
    in_features = x.shape[-1]
    K_p, N_p = w_kn.shape
    out_dtype = x.dtype
    lead_shape = x.shape[:-1]

    x2d = x.reshape(-1, in_features)
    if compute_dtype is not None:
        x2d = x2d.astype(compute_dtype)
    M = x2d.shape[0]

    xi = jnp.dtype(x2d.dtype).itemsize
    wi = jnp.dtype(w_kn.dtype).itemsize
    oi = jnp.dtype(out_dtype).itemsize
    sub = max(_SUBLANE.get(xi, 8), _SUBLANE.get(oi, 8))

    # Balanced, dtype-aware M tiling; pad only the activation per call.
    tm_e, M_p = _plan_tile(M, tm, sub)
    if (M_p, K_p) != (M, in_features):
        x2d = jnp.pad(x2d, ((0, M_p - M), (0, K_p - in_features)))

    grid_m, grid_n, grid_k = M_p // tm_e, N_p // tn_e, K_p // tk_e
    grid = (grid_m, grid_n, grid_k)

    x_spec = pl.BlockSpec((tm_e, tk_e), lambda i, j, k: (i, k))
    # TODO(synk): sweep pipeline_mode=pl.Buffered(3) on the weight stream for
    #             decode-sized (grid_m == 1) calls once measured on hardware.
    w_spec = pl.BlockSpec((tk_e, tn_e), lambda i, j, k: (k, j))
    o_spec = pl.BlockSpec((tm_e, tn_e), lambda i, j, k: (i, j))
    out_shape = jax.ShapeDtypeStruct((M_p, N_p), out_dtype)
    scratch = [pltpu.VMEM((tm_e, tn_e), jnp.float32)]

    # Scoped VMEM sized from the double-buffered tile footprint (+ headroom),
    # capped at 64 MiB so v7x (64 MiB physical / TC) configs stay legal.
    tile_bytes = (2 * (tm_e * tk_e * xi + tk_e * tn_e * wi + tm_e * tn_e * oi)
                  + tm_e * tn_e * 4 + 2 * tn_e * 4)
    vmem_limit = int(min(max(tile_bytes + (8 << 20), 32 << 20), 64 << 20))

    cparams = pltpu.CompilerParams(
        dimension_semantics=("parallel", "parallel", "arbitrary"),
        vmem_limit_bytes=vmem_limit)

    cost = pl.CostEstimate(
        flops=2 * M_p * N_p * K_p,
        transcendentals=0,
        bytes_accessed=(M_p * K_p * xi + grid_m * K_p * N_p * wi
                        + M_p * N_p * oi))

    if b_row is not None:
        b_spec = pl.BlockSpec((1, tn_e), lambda i, j, k: (0, j))
        out2d = pl.pallas_call(
            _matmul_bias_kernel,
            out_shape=out_shape,
            grid=grid,
            in_specs=[x_spec, w_spec, b_spec],
            out_specs=o_spec,
            scratch_shapes=scratch,
            compiler_params=cparams,
            cost_estimate=cost,
        )(x2d, w_kn, b_row)
    else:
        out2d = pl.pallas_call(
            _matmul_nobias_kernel,
            out_shape=out_shape,
            grid=grid,
            in_specs=[x_spec, w_spec],
            out_specs=o_spec,
            scratch_shapes=scratch,
            compiler_params=cparams,
            cost_estimate=cost,
        )(x2d, w_kn)

    out2d = out2d[:M, :out_features]
    return out2d.reshape(*lead_shape, out_features)


# --------------------------- module wrapper ---------------------------------


class ColumnParallelLinear:
    """Pallas TPU ColumnParallelLinear forward (tp_size=1).

    Weight is stored in torch nn.Linear layout (output_size, input_size); it
    is transposed to a lane-dense (K, N) layout, optionally cast, and padded
    ONCE at construction (load time).  __call__ returns (output, output_bias)
    with the same semantics as the PyTorch module.

    Callers that can tolerate bf16 math should pass compute_dtype=jnp.bfloat16
    (f32 matmul is emulated on the MXU at ~3-6x bf16 cost); the accumulator
    stays f32 either way.  tn/tk stay multiples of 128 on every generation.
    """

    def __init__(self, weight, bias=None, *, skip_bias_add=False,
                 gather_output=False, tm=256, tn=512, tk=1024,
                 compute_dtype=None):
        weight = jnp.asarray(weight)
        assert weight.ndim == 2
        self.out_features, self.in_features = weight.shape
        self.skip_bias_add = skip_bias_add
        self.gather_output = gather_output      # identity at tp_size=1
        self.bias = bias                        # original object, returned as-is
        self.compute_dtype = compute_dtype
        self.tm = int(tm)

        # Static (K, N) tile plan; lane dims are 128-multiples, balanced so the
        # last tile is not mostly padding.
        self.tk_e, self.K_p = _plan_tile(self.in_features, tk, _LANE)
        self.tn_e, self.N_p = _plan_tile(self.out_features, tn, _LANE)

        # One-time weight prep: (N, K) -> padded (K_p, N_p) lane-dense MXU RHS.
        w_kn = weight.T
        if compute_dtype is not None:
            w_kn = w_kn.astype(compute_dtype)
        if (self.K_p, self.N_p) != (self.in_features, self.out_features):
            w_kn = jnp.pad(w_kn, ((0, self.K_p - self.in_features),
                                  (0, self.N_p - self.out_features)))
        self.w_kn = jax.device_put(w_kn)

        if (bias is not None) and (not skip_bias_add):
            b_row = jnp.asarray(bias).astype(jnp.float32).reshape(
                1, self.out_features)
            if self.N_p != self.out_features:
                b_row = jnp.pad(b_row,
                                ((0, 0), (0, self.N_p - self.out_features)))
            self.b_row = jax.device_put(b_row)
        else:
            self.b_row = None

    def __call__(self, x):
        output = _cpl_forward(
            x, self.w_kn, self.b_row,
            out_features=self.out_features,
            tm=self.tm, tk_e=self.tk_e, tn_e=self.tn_e,
            compute_dtype=self.compute_dtype)
        # gather_output is identity with tp_size=1 (no all-gather needed).
        # TODO(synk): remote-DMA all-gather for tp_size > 1 not implemented.
        output_bias = self.bias if self.skip_bias_add else None
        return output, output_bias

    forward = __call__


def column_parallel_linear(x, weight, bias=None, **kwargs):
    """One-shot convenience wrapper (re-preps the weight each call; prefer
    constructing ColumnParallelLinear once and reusing it)."""
    return ColumnParallelLinear(weight, bias, **kwargs)(x)


# ------------------------------- tests --------------------------------------


if __name__ == "__main__":
    key = jax.random.PRNGKey(0)
    kx, kw, kb, kx2, kw2, kx3, kw3, kb3 = jax.random.split(key, 8)

    # --- Test 1: module-like small config (input_size=32, output_size=64,
    #             bias=True, tp_size=1), x = (batch=2, seq=8, input_size). ---
    input_size, output_size = 32, 64
    batch, seq = 2, 8
    x = jax.random.normal(kx, (batch, seq, input_size), dtype=jnp.float32)
    weight = jax.random.normal(kw, (output_size, input_size),
                               dtype=jnp.float32) * 0.05
    bias = jax.random.normal(kb, (output_size,), dtype=jnp.float32) * 0.1

    layer = ColumnParallelLinear(weight, bias)
    out, out_bias = layer(x)
    out = jax.block_until_ready(out)
    ref = x @ weight.T + bias
    assert out.shape == (batch, seq, output_size)
    assert out_bias is None
    assert jnp.allclose(out, ref, atol=1e-4, rtol=1e-4)

    # skip_bias_add=True path: bias NOT added, returned (same object) instead.
    layer_sb = ColumnParallelLinear(weight, bias, skip_bias_add=True)
    out_sb, out_bias_sb = layer_sb(x)
    out_sb = jax.block_until_ready(out_sb)
    assert jnp.allclose(out_sb, x @ weight.T, atol=1e-4, rtol=1e-4)
    assert out_bias_sb is bias

    # --- Test 2: exercise the full 3-D tiled grid (multi-block M/N/K) with
    #             small explicit tiles and a non-tile-multiple M. ---
    in2, out2_f = 256, 384
    x2 = jax.random.normal(kx2, (4, 23, in2), dtype=jnp.float32)   # M=92 pads
    w2 = jax.random.normal(kw2, (out2_f, in2), dtype=jnp.float32) * 0.02
    out2, _ = column_parallel_linear(x2, w2, None, tm=32, tn=128, tk=128)
    out2 = jax.block_until_ready(out2)
    ref2 = x2 @ w2.T
    assert out2.shape == (4, 23, out2_f)
    assert jnp.allclose(out2, ref2, atol=1e-3, rtol=1e-3)

    # --- Test 3: bf16 path (16-row sublane packing, default big tiles). ---
    in3, out3_f = 256, 512
    x3 = jax.random.normal(kx3, (2, 8, in3), dtype=jnp.bfloat16)
    w3 = (jax.random.normal(kw3, (out3_f, in3), dtype=jnp.float32)
          * 0.03).astype(jnp.bfloat16)
    b3 = (jax.random.normal(kb3, (out3_f,), dtype=jnp.float32)
          * 0.1).astype(jnp.bfloat16)
    layer3 = ColumnParallelLinear(w3, b3)
    out3, _ = layer3(x3)
    out3 = jax.block_until_ready(out3)
    ref3 = (x3.astype(jnp.float32) @ w3.astype(jnp.float32).T
            + b3.astype(jnp.float32))
    assert out3.shape == (2, 8, out3_f)
    assert jnp.allclose(out3.astype(jnp.float32), ref3, atol=5e-2, rtol=5e-2)

    print("KERNEL_OK")
</pallas_src>

<mosaic_0001>
module attributes {stable_mosaic.version = 11 : i64} {
  func.func @_matmul_bias_kernel(%arg0: i32, %arg1: i32, %arg2: i32, %arg3: memref<16x128xf32, #tpu.memory_space<vmem>>, %arg4: memref<128x128xf32, #tpu.memory_space<vmem>>, %arg5: memref<1x128xf32, #tpu.memory_space<vmem>>, %arg6: memref<16x128xf32, #tpu.memory_space<vmem>>, %arg7: memref<16x128xf32, #tpu.memory_space<vmem>>) attributes {dimension_semantics = [#tpu.dimension_semantics<parallel>, #tpu.dimension_semantics<parallel>, #tpu.dimension_semantics<arbitrary>], iteration_bounds = array<i64: 1, 1, 1>, scalar_prefetch = 0 : i64, scratch_operands = 1 : i64, tpu.core_type = #tpu.core_type<tc>, window_params = [{transform_indices = @transform_0, window_bounds = array<i64: 16, 128>}, {transform_indices = @transform_1, window_bounds = array<i64: 128, 128>}, {transform_indices = @transform_2, window_bounds = array<i64: 1, 128>}, {transform_indices = @transform_3, window_bounds = array<i64: 16, 128>}]} {
    %c0_i32 = arith.constant 0 : i32
    %0 = arith.cmpi eq, %arg2, %c0_i32 : i32
    %1 = arith.extui %0 : i1 to i32
    %c0_i32_0 = arith.constant 0 : i32
    %2 = arith.cmpi ne, %1, %c0_i32_0 : i32
    scf.if %2 {
      %c0_10 = arith.constant 0 : index
      %c0_11 = arith.constant 0 : index
      %12 = vector.load %arg5[%c0_10, %c0_11] : memref<1x128xf32, #tpu.memory_space<vmem>>, vector<1x128xf32>
      %13 = vector.shape_cast %12 : vector<1x128xf32> to vector<1x128xf32>
      %14 = vector.broadcast %13 : vector<1x128xf32> to vector<16x128xf32>
      %c0_12 = arith.constant 0 : index
      %c0_13 = arith.constant 0 : index
      %15 = vector.load %arg7[%c0_12, %c0_13] : memref<16x128xf32, #tpu.memory_space<vmem>>, vector<16x128xf32>
      tpu.vector_store %arg7[%c0_12, %c0_13], %14 {strides = array<i32>} : memref<16x128xf32, #tpu.memory_space<vmem>>, vector<16x128xf32>,
    } else {
    }
    %c0 = arith.constant 0 : index
    %c0_1 = arith.constant 0 : index
    %3 = vector.load %arg7[%c0, %c0_1] : memref<16x128xf32, #tpu.memory_space<vmem>>, vector<16x128xf32>
    %c0_2 = arith.constant 0 : index
    %c0_3 = arith.constant 0 : index
    %4 = vector.load %arg3[%c0_2, %c0_3] : memref<16x128xf32, #tpu.memory_space<vmem>>, vector<16x128xf32>
    %c0_4 = arith.constant 0 : index
    %c0_5 = arith.constant 0 : index
    %5 = vector.load %arg4[%c0_4, %c0_5] : memref<128x128xf32, #tpu.memory_space<vmem>>, vector<128x128xf32>
    %cst = arith.constant dense<0.000000e+00> : vector<16x128xf32>
    %6 = tpu.matmul %4, %5, %cst {dimension_numbers = #tpu.dot_dimension_numbers<[1], [0], [0], [1], [0, 0, 1, 1], [], []>} : vector<16x128xf32>, vector<128x128xf32>, vector<16x128xf32> -> vector<16x128xf32>
    %7 = arith.addf %3, %6 : vector<16x128xf32>
    %c0_6 = arith.constant 0 : index
    %c0_7 = arith.constant 0 : index
    %8 = vector.load %arg7[%c0_6, %c0_7] : memref<16x128xf32, #tpu.memory_space<vmem>>, vector<16x128xf32>
    tpu.vector_store %arg7[%c0_6, %c0_7], %7 {strides = array<i32>} : memref<16x128xf32, #tpu.memory_space<vmem>>, vector<16x128xf32>,
    %c0_i32_8 = arith.constant 0 : i32
    %9 = arith.cmpi eq, %arg2, %c0_i32_8 : i32
    %10 = arith.extui %9 : i1 to i32
    %c0_i32_9 = arith.constant 0 : i32
    %11 = arith.cmpi ne, %10, %c0_i32_9 : i32
    scf.if %11 {
      %c0_10 = arith.constant 0 : index
      %c0_11 = arith.constant 0 : index
      %12 = vector.load %arg7[%c0_10, %c0_11] : memref<16x128xf32, #tpu.memory_space<vmem>>, vector<16x128xf32>
      %c0_12 = arith.constant 0 : index
      %c0_13 = arith.constant 0 : index
      %13 = vector.load %arg6[%c0_12, %c0_13] : memref<16x128xf32, #tpu.memory_space<vmem>>, vector<16x128xf32>
      tpu.vector_store %arg6[%c0_12, %c0_13], %12 {strides = array<i32>} : memref<16x128xf32, #tpu.memory_space<vmem>>, vector<16x128xf32>,
    } else {
    }
    return
  }
  func.func @transform_0(%arg0: i32, %arg1: i32, %arg2: i32) -> (i32, i32) {
    %c0_i32 = arith.constant 0 : i32
    return %arg0, %arg2 : i32, i32
  }
  func.func @transform_1(%arg0: i32, %arg1: i32, %arg2: i32) -> (i32, i32) {
    %c0_i32 = arith.constant 0 : i32
    return %arg2, %arg1 : i32, i32
  }
  func.func @transform_2(%arg0: i32, %arg1: i32, %arg2: i32) -> (i32, i32) {
    %c0_i32 = arith.constant 0 : i32
    %c0_i32_0 = arith.constant 0 : i32
    return %c0_i32, %arg1 : i32, i32
  }
  func.func @transform_3(%arg0: i32, %arg1: i32, %arg2: i32) -> (i32, i32) {
    %c0_i32 = arith.constant 0 : i32
    return %arg0, %arg1 : i32, i32
  }
}

</mosaic_0001>

<llo_original>
// kernel: _cpl_forward.1
$region0: #{_cpl_forward.1}
  #allocation0 [shape = 'u32[]', space=smem, size = 0x4, offset = 0x4, fixed_abs, tag = 'smem constant byte address 0x4 - core index']
  #allocation1 [shape = 'u32[144,128]{1,0:T(1,128)}', space=vmem, size = 0x12000, scoped, tag = 'internal scratch']
  #allocation2 [shape = 'f32[16,128]{1,0:T(8,128)}', space=vmem, size = 0x2000, scoped, tag = 'scratch operand']
  %s0 = inlined_call_operand.vmem [shape: f32[16,128], index: 0, kind: input, shape index: {}]
  %s1 = inlined_call_operand.hbm [shape: f32[128,128], index: 1, kind: input, shape index: {}]
  %s2 = inlined_call_operand.vmem [shape: f32[1,128], index: 2, kind: input, shape index: {}]
  %s3 = inlined_call_operand.vmem [shape: f32[16,128], index: 3, kind: output, shape index: {}]
  %s4 = sld [smem:[#allocation0]]
  $region34: #{_cpl_forward.1} parent=0
    _
  %s6 = ssub.s32 1, %s4
  %s7 = scalar_select 0, %s6, %s4
  $region1: #{_cpl_forward.1} parent=0
    #allocation3 [shape = 'u8[65536]{0}', space=vmem, size = 0x10000, scoped, tag = 'input window, operand 1, single buffered']
    #allocation4 [shape = 's32[1]{0}', space=sflag, size = 0x4, scoped, tag = 'scoped memory for _cpl_forward.1']
    %8 = vsyncpa [#allocation4], 0
    // Predicated region
    $region2: #{_cpl_forward.1} parent=1 // pred_check
      _
    $region3: #{_cpl_forward.1} parent=1 // pred_check_branch
      %10 = sbr.rel (0) target = $region5
    $region4: #{_cpl_forward.1} parent=1 // pred_region
      _
    $region5: #{_cpl_forward.1} parent=1 // pred_fallthru
      _
    // Predicated region
    $region6: #{_cpl_forward.1} parent=1 // pred_check
      _
    $region7: #{_cpl_forward.1} parent=1 // pred_check_branch
      %12 = sbr.rel (0) target = $region9
    $region8: #{_cpl_forward.1} parent=1 // pred_region
      %s14 = ssub.s32 2048, 2048
      %15 = vsyncadd [#allocation4], %s14
      %s16 = sshll.u32 [#allocation3], 4
      %s17 = int_to_ptr.vmem [resolvable:$true] %s16
      %22 = dma.hbm_to_vmem [thread:$0]  %s1, 2048, %s17, [#allocation4], 128, 128, 8
    $region9: #{_cpl_forward.1} parent=1 // pred_fallthru
      _
    // Predicated region
    $region10: #{_cpl_forward.1} parent=1 // pred_check
      _
    $region11: #{_cpl_forward.1} parent=1 // pred_check_branch
      %24 = sbr.rel (0) target = $region13
    $region12: #{_cpl_forward.1} parent=1 // pred_region
      _
    $region13: #{_cpl_forward.1} parent=1 // pred_fallthru
      _
    // Predicated region
    $region14: #{_cpl_forward.1} parent=1 // pred_check
      _
    $region15: #{_cpl_forward.1} parent=1 // pred_check_branch
      %26 = sbr.rel (0) target = $region17
    $region16: #{_cpl_forward.1} parent=1 // pred_region
      %27 = dma.done [#allocation4], 2048
    $region17: #{_cpl_forward.1} parent=1 // pred_fallthru
      _
    %p28 = scmp.eq.s32.totalorder 0, 0
    // Predicated region
    $region18: #{_cpl_forward.1} parent=1 // pred_check
      %p29 = pneg %p28
    $region19: #{_cpl_forward.1} parent=1 // pred_check_branch
      %31 = sbr.rel (%p29) target = $region21
    $region20: #{_cpl_forward.1} parent=1 // pred_region
      %v32 = vld [vmem:[%s2] sm:$0x1]
      %v34 = vlaneseq
      %v35 = vshrl.u32 %v34, 7
      %v36 = vsub.s32 0, %v35
      %v37 = vrot.slane %v32, %v36
      %39 = vst [vmem:[#allocation2] sm:$0xff] %v37
      %40 = vst [vmem:[#allocation2 + $0x8] sm:$0xff] %v37
    $region21: #{_cpl_forward.1} parent=1 // pred_fallthru
      _
    %v41 = vld [vmem:[#allocation2] sm:$0xff]
    %v42 = vld [vmem:[#allocation2 + $0x8] sm:$0xff]
    %v43 = vld [vmem:[%s0] sm:$0xff]
    %v44 = vld [vmem:[%s0 + $0x8] sm:$0xff]
    %v45 = vld [vmem:[#allocation3] sm:$0xff]
    %v46 = vld [vmem:[#allocation3 + $0x8] sm:$0xff]
    %v47 = vld [vmem:[#allocation3 + $0x10] sm:$0xff]
    %v48 = vld [vmem:[#allocation3 + $0x18] sm:$0xff]
    %v49 = vld [vmem:[#allocation3 + $0x20] sm:$0xff]
    %v50 = vld [vmem:[#allocation3 + $0x28] sm:$0xff]
    %v51 = vld [vmem:[#allocation3 + $0x30] sm:$0xff]
    %v52 = vld [vmem:[#allocation3 + $0x38] sm:$0xff]
    %v53 = vld [vmem:[#allocation3 + $0x40] sm:$0xff]
    %v54 = vld [vmem:[#allocation3 + $0x48] sm:$0xff]
    %v55 = vld [vmem:[#allocation3 + $0x50] sm:$0xff]
    %v56 = vld [vmem:[#allocation3 + $0x58] sm:$0xff]
    %v57 = vld [vmem:[#allocation3 + $0x60] sm:$0xff]
    %v58 = vld [vmem:[#allocation3 + $0x68] sm:$0xff]
    %v59 = vld [vmem:[#allocation3 + $0x70] sm:$0xff]
    %v60 = vld [vmem:[#allocation3 + $0x78] sm:$0xff]
    %61 = vmatprep.subr.mxu0 0.0
    %62 = vmatpush1.msra.mxu0 %v60
    %63 = vmatprep.subr.mxu0 0.0
    %64 = vmatpush1.msra.mxu0 %v59
    %65 = vmatprep.subr.mxu0 0.0
    %66 = vmatpush1.msra.mxu0 %v58
    %67 = vmatprep.subr.mxu0 0.0
    %68 = vmatpush1.msra.mxu0 %v57
    %69 = vmatprep.subr.mxu0 0.0
    %70 = vmatpush1.msra.mxu0 %v56
    %71 = vmatprep.subr.mxu0 0.0
    %72 = vmatpush1.msra.mxu0 %v55
    %73 = vmatprep.subr.mxu0 0.0
    %74 = vmatpush1.msra.mxu0 %v54
    %75 = vmatprep.subr.mxu0 0.0
    %76 = vmatpush1.msra.mxu0 %v53
    %77 = vmatprep.subr.mxu0 0.0
    %78 = vmatpush1.msra.mxu0 %v52
    %79 = vmatprep.subr.mxu0 0.0
    %80 = vmatpush1.msra.mxu0 %v51
    %81 = vmatprep.subr.mxu0 0.0
    %82 = vmatpush1.msra.mxu0 %v50
    %83 = vmatprep.subr.mxu0 0.0
    %84 = vmatpush1.msra.mxu0 %v49
    %85 = vmatprep.subr.mxu0 0.0
    %86 = vmatpush1.msra.mxu0 %v48
    %87 = vmatprep.subr.mxu0 0.0
    %88 = vmatpush1.msra.mxu0 %v47
    %89 = vmatprep.subr.mxu0 0.0
    %90 = vmatpush1.msra.mxu0 %v46
    %91 = vmatprep.subr.mxu0 0.0
    %92 = vmatpush1.msra.mxu0 %v45
    %93 = vmatprep.subr.mxu0 0.0
    %94 = vmatpush2.msra.mxu0 0.0
    %95 = vmatprep.subr.mxu0 0.0
    %96 = vmatpush2.msra.mxu0 0.0
    %97 = vmatprep.subr.mxu0 0.0
    %98 = vmatpush2.msra.mxu0 0.0
    %99 = vmatprep.subr.mxu0 0.0
    %100 = vmatpush2.msra.mxu0 0.0
    %101 = vmatprep.subr.mxu0 0.0
    %102 = vmatpush2.msra.mxu0 0.0
    %103 = vmatprep.subr.mxu0 0.0
    %104 = vmatpush2.msra.mxu0 0.0
    %105 = vmatprep.subr.mxu0 0.0
    %106 = vmatpush2.msra.mxu0 0.0
    %107 = vmatprep.subr.mxu0 0.0
    %108 = vmatpush2.msra.mxu0 0.0
    %109 = vmatprep.subr.mxu0 0.0
    %110 = vmatpush2.msra.mxu0 0.0
    %111 = vmatprep.subr.mxu0 0.0
    %112 = vmatpush2.msra.mxu0 0.0
    %113 = vmatprep.subr.mxu0 0.0
    %114 = vmatpush2.msra.mxu0 0.0
    %115 = vmatprep.subr.mxu0 0.0
    %116 = vmatpush2.msra.mxu0 0.0
    %117 = vmatprep.subr.mxu0 0.0
    %118 = vmatpush2.msra.mxu0 0.0
    %119 = vmatprep.subr.mxu0 0.0
    %120 = vmatpush2.msra.mxu0 0.0
    %121 = vmatprep.subr.mxu0 0.0
    %122 = vmatpush2.msra.mxu0 0.0
    %123 = vmatprep.subr.mxu0 0.0
    %124 = vmatpush2.msra.mxu0 0.0
    %125 = vmatprep.mubr.f32.mxu0 0.0
    %126 = vmatmul.mubr.f32.gmra.mxu0 %v43
    %v127 = vpop.f32.mrf.mxu0
    %v128 = vadd.f32 0.0, %v127
    %v129 = vpop.f32.mrf.mxu0
    %130 = vmatprep.mubr.f32.mxu0 0.0
    %131 = vmatmul.mubr.f32.gmra.mxu0 %v44
    %v132 = vpop.f32.mrf.mxu0
    %v133 = vadd.f32 0.0, %v132
    %v134 = vpop.f32.mrf.mxu0
    %135 = vdwg.mxu0
    %v136 = vadd.f32 %v41, %v128
    %v137 = vadd.f32 %v42, %v133
    %138 = vst [vmem:[#allocation2] sm:$0xff] %v136
    %139 = vst [vmem:[#allocation2 + $0x8] sm:$0xff] %v137
    // Predicated region
    $region22: #{_cpl_forward.1} parent=1 // pred_check
      %p140 = pneg %p28
    $region23: #{_cpl_forward.1} parent=1 // pred_check_branch
      %142 = sbr.rel (%p140) target = $region25
    $region24: #{_cpl_forward.1} parent=1 // pred_region
      %v143 = vld [vmem:[#allocation2] sm:$0xff]
      %v144 = vld [vmem:[#allocation2 + $0x8] sm:$0xff]
      %145 = vst [vmem:[%s3] sm:$0xff] %v143
      %146 = vst [vmem:[%s3 + $0x8] sm:$0xff] %v144
    $region25: #{_cpl_forward.1} parent=1 // pred_fallthru
      _
    // Predicated region
    $region26: #{_cpl_forward.1} parent=1 // pred_check
      _
    $region27: #{_cpl_forward.1} parent=1 // pred_check_branch
      %148 = sbr.rel (0) target = $region29
    $region28: #{_cpl_forward.1} parent=1 // pred_region
      _
    $region29: #{_cpl_forward.1} parent=1 // pred_fallthru
      _
    // Predicated region
    $region30: #{_cpl_forward.1} parent=1 // pred_check
      _
    $region31: #{_cpl_forward.1} parent=1 // pred_check_branch
      %150 = sbr.rel (0) target = $region33
    $region32: #{_cpl_forward.1} parent=1 // pred_region
      _
    $region33: #{_cpl_forward.1} parent=1 // pred_fallthru
      _
    %151 = vsyncpa [#allocation4], 1

</llo_original>
